<compile_context>
chip_gen: v7x
topology: tpu7x:2x2x1
jax: 0.10.0
libtpu: 0.0.40
codegen_flags: <defaults>
</compile_context>

<pallas_src>
import numpy as np
import jax
import jax.numpy as jnp
from jax.experimental import pallas as pl
from jax.experimental.pallas import tpu as pltpu

_LANES = 128
_ROW_ALIGN = 32          # satisfies f32 (8,128), bf16 (16,128), int8 (32,128) tiles
_MAX_BLOCK_ROWS = 4096   # (4096,128) f32 block = 2 MiB/buffer; with double-buffered
                         # f32 logits + (<=f32) labels stays inside v5e's 16 MiB
                         # scoped-VMEM default


def _cdiv(a, b):
    return -(-a // b)


def _round_up(x, m):
    return _cdiv(x, m) * m


def _make_kernel(*, steps, n_blocks, block_rows, total, need_mask, acc_sub,
                 gate_valid):
    """Build the kernel closure over static (Python-int) tiling geometry."""

    def kernel(logits_ref, label_ref, acc_ref):
        p = pl.program_id(0)
        i = pl.program_id(1)
        block_id = p * steps + i

        @pl.when(i == 0)
        def _():
            acc_ref[...] = jnp.zeros_like(acc_ref)

        def compute():
            # torch .long(): truncation toward zero, fused here (no extra HBM
            # pass, no int32 clamp for huge magnitudes).
            x = jnp.trunc(logits_ref[...].astype(jnp.float32))
            y = label_ref[...].astype(jnp.float32)
            eps = jnp.float32(1e-07)
            one_eps = jnp.float32(1.0 + 1e-07)
            # NOTE: log(log(1 - x + eps)) is NaN for truncated x >= 1 and
            # log(x + eps) is NaN for truncated x <= -1 -- faithful to the
            # PyTorch module, which is only meaningful for logits in [0, 1).
            return ((y * jnp.float32(-1.4)) * jnp.log(x + eps)
                    - (jnp.float32(1.0) - y) * jnp.log(jnp.log(one_eps - x)))

        def accumulate(val):
            # Purely elementwise (VPU) partial sums into acc_sub independent
            # accumulator rows -- no per-step XLU reduce, no serial scalar RMW.
            acc_ref[...] += jnp.sum(val.reshape(-1, acc_sub, _LANES), axis=0)

        if need_mask:
            # Fast (unmasked) path: every full block except the last valid one.
            if n_blocks > 1:
                @pl.when(block_id < n_blocks - 1)
                def _():
                    accumulate(compute())

            # Masked path: only the last valid block sees the ragged tail
            # (out-of-range lanes may hold garbage from the partial DMA;
            # jnp.where is a select, so NaN/Inf there is harmless).
            @pl.when(block_id == n_blocks - 1)
            def _():
                val = compute()
                row = jax.lax.broadcasted_iota(jnp.int32, val.shape, 0)
                lane = jax.lax.broadcasted_iota(jnp.int32, val.shape, 1)
                lin = (block_id * block_rows + row) * _LANES + lane
                accumulate(jnp.where(lin < total, val, jnp.float32(0.0)))
        elif gate_valid:
            # Grid over-covers by (n_split*steps - n_blocks) clamped blocks;
            # skip their (duplicate) contribution.
            @pl.when(block_id < n_blocks)
            def _():
                accumulate(compute())
        else:
            accumulate(compute())

    return kernel


def cross_entropy(logits, label, *, max_block_rows=_MAX_BLOCK_ROWS):
    assert logits.shape == label.shape
    total = int(np.prod(logits.shape))
    assert total > 0

    # ---- static tiling geometry (all Python ints; shapes are static in JAX,
    #      so no scalar prefetch is needed) ----
    rows = _cdiv(total, _LANES)
    n_split = 2 if rows >= 2 * _ROW_ALIGN else 1          # both TCs on v7x
    block_rows = min(max_block_rows,
                     _round_up(_cdiv(rows, n_split), _ROW_ALIGN))
    n_blocks = _cdiv(rows, block_rows)                     # valid blocks
    if n_blocks < n_split:
        n_split = 1
    steps = _cdiv(n_blocks, n_split)
    acc_sub = 64 if block_rows % 64 == 0 else 32           # wide accumulator

    grid_blocks = n_split * steps
    need_mask = n_blocks * block_rows * _LANES > total     # ragged tail exists
    gate_valid = grid_blocks > n_blocks                     # clamped extra block

    flat_logits = logits.reshape(-1)
    flat_label = label.reshape(-1)
    lane_pad = rows * _LANES - total
    if lane_pad:
        # Only to make the (rows, 128) reshape legal (< 128 elements); the
        # padded tail is zeroed in-kernel by the lin < total mask, so no
        # wrapper-side correction is needed.
        flat_logits = jnp.pad(flat_logits, (0, lane_pad))
        flat_label = jnp.pad(flat_label, (0, lane_pad))
    logits2d = flat_logits.reshape(rows, _LANES)
    label2d = flat_label.reshape(rows, _LANES)

    if gate_valid:
        def in_map(p, i):
            # Clamp blocks past the data to the last valid block (their
            # contribution is skipped in-kernel); keeps every DMA in-bounds.
            return (jnp.minimum(p * steps + i, n_blocks - 1), 0)
    else:
        def in_map(p, i):
            return (p * steps + i, 0)

    kernel = _make_kernel(steps=steps, n_blocks=n_blocks, block_rows=block_rows,
                          total=total, need_mask=need_mask, acc_sub=acc_sub,
                          gate_valid=gate_valid)

    partials = pl.pallas_call(
        kernel,
        out_shape=jax.ShapeDtypeStruct((n_split, acc_sub, _LANES), jnp.float32),
        grid_spec=pltpu.PrefetchScalarGridSpec(
            num_scalar_prefetch=0,
            grid=(n_split, steps),
            in_specs=[
                pl.BlockSpec((block_rows, _LANES), in_map),
                pl.BlockSpec((block_rows, _LANES), in_map),
            ],
            out_specs=pl.BlockSpec((None, acc_sub, _LANES),
                                   lambda p, i: (p, 0, 0)),
        ),
        compiler_params=pltpu.CompilerParams(
            dimension_semantics=("parallel", "arbitrary")),
    )(logits2d, label2d)

    total_sum = jnp.sum(partials, dtype=jnp.float32)
    return total_sum * jnp.float32(1.0 / total)


def _reference(logits, label):
    x = jnp.trunc(logits.astype(jnp.float32))
    y = label.astype(jnp.float32)
    eps = 1e-07
    val = (-1.4 * y * jnp.log(x + eps)
           - (1.0 - y) * jnp.log(jnp.log(1.0 - x + eps)))
    return jnp.mean(val)


if __name__ == "__main__":
    key = jax.random.PRNGKey(0)
    k1, k2 = jax.random.split(key)
    # "logits" behave like per-pixel probabilities in [0, 1) (so .long() -> 0);
    # labels are hard 0/1 masks kept in the narrowest dtype (int8) for bandwidth.
    shape = (2, 4, 16, 16)
    logits = jax.random.uniform(k1, shape, dtype=jnp.float32)
    label = (jax.random.uniform(k2, shape) > 0.5).astype(jnp.int8)

    out = cross_entropy(logits, label)
    out = jax.block_until_ready(out)

    ref = _reference(logits, label)
    assert jnp.allclose(out, ref, rtol=1e-5, atol=1e-5), (out, ref)
    print("KERNEL_OK")
</pallas_src>

<mosaic_0001>
module attributes {stable_mosaic.version = 11 : i64} {
  func.func @kernel(%arg0: i32, %arg1: i32, %arg2: memref<32x128xf32, #tpu.memory_space<vmem>>, %arg3: memref<32x128xi8, #tpu.memory_space<vmem>>, %arg4: memref<1x32x128xf32, #tpu.memory_space<vmem>>) attributes {dimension_semantics = [#tpu.dimension_semantics<parallel>, #tpu.dimension_semantics<arbitrary>], iteration_bounds = array<i64: 1, 1>, scalar_prefetch = 0 : i64, scratch_operands = 0 : i64, tpu.core_type = #tpu.core_type<tc>, window_params = [{transform_indices = @transform_0, window_bounds = array<i64: 32, 128>}, {transform_indices = @transform_1, window_bounds = array<i64: 32, 128>}, {transform_indices = @transform_2, window_bounds = array<i64: 1, 32, 128>}]} {
    %c1_i32 = arith.constant 1 : i32
    %0 = arith.muli %arg0, %c1_i32 : i32
    %1 = arith.addi %0, %arg1 : i32
    %c0_i32 = arith.constant 0 : i32
    %2 = arith.cmpi eq, %arg1, %c0_i32 : i32
    %3 = arith.extui %2 : i1 to i32
    %c0_i32_0 = arith.constant 0 : i32
    %4 = arith.cmpi ne, %3, %c0_i32_0 : i32
    scf.if %4 {
      %cst = arith.constant 0.000000e+00 : f32
      %8 = vector.broadcast %cst : f32 to vector<32x128xf32>
      %c0 = arith.constant 0 : index
      %c0_3 = arith.constant 0 : index
      %c0_4 = arith.constant 0 : index
      %9 = vector.load %arg4[%c0, %c0_3, %c0_4] : memref<1x32x128xf32, #tpu.memory_space<vmem>>, vector<1x32x128xf32>
      %10 = vector.shape_cast %9 : vector<1x32x128xf32> to vector<32x128xf32>
      %11 = vector.shape_cast %8 : vector<32x128xf32> to vector<1x32x128xf32>
      tpu.vector_store %arg4[%c0, %c0_3, %c0_4], %11 {strides = array<i32>} : memref<1x32x128xf32, #tpu.memory_space<vmem>>, vector<1x32x128xf32>,
    } else {
    }
    %c0_i32_1 = arith.constant 0 : i32
    %5 = arith.cmpi eq, %1, %c0_i32_1 : i32
    %6 = arith.extui %5 : i1 to i32
    %c0_i32_2 = arith.constant 0 : i32
    %7 = arith.cmpi ne, %6, %c0_i32_2 : i32
    scf.if %7 {
      %c0 = arith.constant 0 : index
      %c0_3 = arith.constant 0 : index
      %8 = vector.load %arg2[%c0, %c0_3] : memref<32x128xf32, #tpu.memory_space<vmem>>, vector<32x128xf32>
      %cst = arith.constant 0.000000e+00 : f32
      %9 = vector.broadcast %cst : f32 to vector<32x128xf32>
      %10 = arith.cmpf olt, %8, %9 : vector<32x128xf32>
      %11 = math.ceil %8 : vector<32x128xf32>
      %12 = math.floor %8 : vector<32x128xf32>
      %13 = arith.select %10, %11, %12 : vector<32x128xi1>, vector<32x128xf32>
      %c0_4 = arith.constant 0 : index
      %c0_5 = arith.constant 0 : index
      %14 = vector.load %arg3[%c0_4, %c0_5] : memref<32x128xi8, #tpu.memory_space<vmem>>, vector<32x128xi8>
      %15 = arith.sitofp %14 : vector<32x128xi8> to vector<32x128xf32>
      %cst_6 = arith.constant -1.400000e+00 : f32
      %16 = vector.broadcast %cst_6 : f32 to vector<32x128xf32>
      %17 = arith.mulf %15, %16 : vector<32x128xf32>
      %cst_7 = arith.constant 1.000000e-07 : f32
      %18 = vector.broadcast %cst_7 : f32 to vector<32x128xf32>
      %19 = arith.addf %13, %18 : vector<32x128xf32>
      %20 = math.log %19 : vector<32x128xf32>
      %21 = arith.mulf %17, %20 : vector<32x128xf32>
      %cst_8 = arith.constant 1.000000e+00 : f32
      %22 = vector.broadcast %cst_8 : f32 to vector<32x128xf32>
      %23 = arith.subf %22, %15 : vector<32x128xf32>
      %cst_9 = arith.constant 1.00000012 : f32
      %24 = vector.broadcast %cst_9 : f32 to vector<32x128xf32>
      %25 = arith.subf %24, %13 : vector<32x128xf32>
      %26 = math.log %25 : vector<32x128xf32>
      %27 = math.log %26 : vector<32x128xf32>
      %28 = arith.mulf %23, %27 : vector<32x128xf32>
      %29 = arith.subf %21, %28 : vector<32x128xf32>
      %30 = tpu.iota {dimensions = array<i32: 0>} : vector<32x128xi32>
      %31 = tpu.iota {dimensions = array<i32: 1>} : vector<32x128xi32>
      %c32_i32 = arith.constant 32 : i32
      %32 = arith.muli %1, %c32_i32 : i32
      %33 = vector.broadcast %32 : i32 to vector<32x128xi32>
      %34 = arith.addi %33, %30 : vector<32x128xi32>
      %c128_i32 = arith.constant 128 : i32
      %35 = vector.broadcast %c128_i32 : i32 to vector<32x128xi32>
      %36 = arith.muli %34, %35 : vector<32x128xi32>
      %37 = arith.addi %36, %31 : vector<32x128xi32>
      %c2048_i32 = arith.constant 2048 : i32
      %38 = vector.broadcast %c2048_i32 : i32 to vector<32x128xi32>
      %39 = arith.cmpi slt, %37, %38 : vector<32x128xi32>
      %cst_10 = arith.constant 0.000000e+00 : f32
      %40 = vector.broadcast %cst_10 : f32 to vector<32x128xf32>
      %41 = arith.select %39, %29, %40 : vector<32x128xi1>, vector<32x128xf32>
      %c0_11 = arith.constant 0 : index
      %c0_12 = arith.constant 0 : index
      %c0_13 = arith.constant 0 : index
      %42 = vector.load %arg4[%c0_11, %c0_12, %c0_13] : memref<1x32x128xf32, #tpu.memory_space<vmem>>, vector<1x32x128xf32>
      %43 = vector.shape_cast %42 : vector<1x32x128xf32> to vector<32x128xf32>
      %44 = vector.shape_cast %41 : vector<32x128xf32> to vector<1x32x128xf32>
      %cst_14 = arith.constant dense<0.000000e+00> : vector<32x128xf32>
      %45 = vector.multi_reduction <add>, %44, %cst_14 [0] : vector<1x32x128xf32> to vector<32x128xf32>
      %46 = arith.addf %43, %45 : vector<32x128xf32>
      %c0_15 = arith.constant 0 : index
      %c0_16 = arith.constant 0 : index
      %c0_17 = arith.constant 0 : index
      %47 = vector.load %arg4[%c0_15, %c0_16, %c0_17] : memref<1x32x128xf32, #tpu.memory_space<vmem>>, vector<1x32x128xf32>
      %48 = vector.shape_cast %47 : vector<1x32x128xf32> to vector<32x128xf32>
      %49 = vector.shape_cast %46 : vector<32x128xf32> to vector<1x32x128xf32>
      tpu.vector_store %arg4[%c0_15, %c0_16, %c0_17], %49 {strides = array<i32>} : memref<1x32x128xf32, #tpu.memory_space<vmem>>, vector<1x32x128xf32>,
    } else {
    }
    return
  }
  func.func @transform_0(%arg0: i32, %arg1: i32) -> (i32, i32) {
    %c1_i32 = arith.constant 1 : i32
    %0 = arith.muli %arg0, %c1_i32 : i32
    %1 = arith.addi %0, %arg1 : i32
    %c0_i32 = arith.constant 0 : i32
    %c0_i32_0 = arith.constant 0 : i32
    return %1, %c0_i32 : i32, i32
  }
  func.func @transform_1(%arg0: i32, %arg1: i32) -> (i32, i32) {
    %c1_i32 = arith.constant 1 : i32
    %0 = arith.muli %arg0, %c1_i32 : i32
    %1 = arith.addi %0, %arg1 : i32
    %c0_i32 = arith.constant 0 : i32
    %c0_i32_0 = arith.constant 0 : i32
    return %1, %c0_i32 : i32, i32
  }
  func.func @transform_2(%arg0: i32, %arg1: i32) -> (i32, i32, i32) {
    %c0_i32 = arith.constant 0 : i32
    %c0_i32_0 = arith.constant 0 : i32
    %c0_i32_1 = arith.constant 0 : i32
    return %arg0, %c0_i32, %c0_i32_0 : i32, i32, i32
  }
}

</mosaic_0001>

<llo_original>
// kernel: tpu_custom_call.1
$region0: #{tpu_custom_call.1}
  #allocation0 [shape = 'u32[]', space=smem, size = 0x4, offset = 0x4, fixed_abs, tag = 'smem constant byte address 0x4 - core index']
  #allocation1 [shape = 'u32[144,128]{1,0:T(1,128)}', space=vmem, size = 0x12000, scoped, tag = 'internal scratch']
  %s0 = inlined_call_operand.hbm [shape: f32[16,128], index: 0, kind: input, shape index: {}]
  %s1 = inlined_call_operand.hbm [shape: s8[16,128], index: 1, kind: input, shape index: {}]
  %s2 = inlined_call_operand.hbm [shape: f32[1,32,128], index: 2, kind: output, shape index: {}]
  %s3 = sld [smem:[#allocation0]]
  $region34: #{tpu_custom_call.1} parent=0
    _
  %s5 = ssub.s32 1, %s3
  %s6 = scalar_select 0, %s5, %s3
  $region1: #{tpu_custom_call.1} parent=0
    #allocation2 [shape = 'u8[16384]{0}', space=vmem, size = 0x4000, scoped, tag = 'input window, operand 0, single buffered']
    #allocation3 [shape = 's32[1]{0}', space=sflag, size = 0x4, scoped, tag = 'scoped memory for tpu_custom_call.1']
    #allocation4 [shape = 's32[1]{0}', space=sflag, size = 0x4, scoped, tag = 'scoped memory for tpu_custom_call.1']
    #allocation5 [shape = 'u8[4096]{0}', space=vmem, size = 0x1000, scoped, tag = 'input window, operand 1, single buffered']
    #allocation6 [shape = 's32[1]{0}', space=sflag, size = 0x4, scoped, tag = 'scoped memory for tpu_custom_call.1']
    #allocation7 [shape = 'u8[16384]{0}', space=vmem, size = 0x4000, scoped, tag = 'output window, operand 0, single buffered']
    %7 = vsyncpa [#allocation3], 0
    %8 = vsyncpa [#allocation6], 0
    %9 = vsyncpa [#allocation4], 0
    // Predicated region
    $region2: #{tpu_custom_call.1} parent=1 // pred_check
      _
    $region3: #{tpu_custom_call.1} parent=1 // pred_check_branch
      %11 = sbr.rel (0) target = $region5
    $region4: #{tpu_custom_call.1} parent=1 // pred_region
      %s12 = sadd.s32 0, 0
      %s13 = smul.u32 4, %s12
      %s14 = ssub.s32 2, %s13
      %s15 = smul.u32 128, %s14
      %s17 = ssub.s32 512, %s15
      %18 = vsyncadd [#allocation3], %s17
      %p19 = scmp.ne.s32.totalorder 0, %s15
      %s20 = smul.addr %s13, 128
      %s21 = scalar_lea.hbm %s0, %s20
      %s22 = smul.u32 8, %s14
      %s23 = sshll.u32 [#allocation2], 4
      %s24 = int_to_ptr.vmem [resolvable:$true] %s23
      %s25 = sshll.u32 %s22, 4
      %29 = dma.hbm_to_vmem [thread:$0]  (%p19), %s21, %s25, %s24, [#allocation3], 128, 128, 8
    $region5: #{tpu_custom_call.1} parent=1 // pred_fallthru
      _
    // Predicated region
    $region6: #{tpu_custom_call.1} parent=1 // pred_check
      _
    $region7: #{tpu_custom_call.1} parent=1 // pred_check_branch
      %31 = sbr.rel (0) target = $region9
    $region8: #{tpu_custom_call.1} parent=1 // pred_region
      %s32 = sadd.s32 0, 0
      %s33 = smul.u32 4, %s32
      %s34 = ssub.s32 2, %s33
      %s35 = smul.u32 32, %s34
      %s37 = ssub.s32 128, %s35
      %38 = vsyncadd [#allocation6], %s37
      %p39 = scmp.ne.s32.totalorder 0, %s35
      %s40 = smul.addr %s33, 32
      %s41 = scalar_lea.hbm %s1, %s40
      %s42 = smul.u32 2, %s34
      %s43 = sshll.u32 [#allocation5], 4
      %s44 = int_to_ptr.vmem [resolvable:$true] %s43
      %s45 = sshll.u32 %s42, 4
      %49 = dma.hbm_to_vmem [thread:$0]  (%p39), %s41, %s45, %s44, [#allocation6], 32, 32, 2
    $region9: #{tpu_custom_call.1} parent=1 // pred_fallthru
      _
    // Predicated region
    $region10: #{tpu_custom_call.1} parent=1 // pred_check
      _
    $region11: #{tpu_custom_call.1} parent=1 // pred_check_branch
      %51 = sbr.rel (0) target = $region13
    $region12: #{tpu_custom_call.1} parent=1 // pred_region
      %52 = dma.done [#allocation3], 512
    $region13: #{tpu_custom_call.1} parent=1 // pred_fallthru
      _
    // Predicated region
    $region14: #{tpu_custom_call.1} parent=1 // pred_check
      _
    $region15: #{tpu_custom_call.1} parent=1 // pred_check_branch
      %54 = sbr.rel (0) target = $region17
    $region16: #{tpu_custom_call.1} parent=1 // pred_region
      %55 = dma.done [#allocation6], 128
    $region17: #{tpu_custom_call.1} parent=1 // pred_fallthru
      _
    %s56 = sadd.s32 0, 0
    %s57 = smul.u32 4, %s56
    %s58 = ssub.s32 2, %s57
    %s59 = smul.u32 128, %s58
    %s60 = sadd.s32 0, 0
    %s61 = smul.u32 4, %s60
    %s62 = ssub.s32 2, %s61
    %s63 = smul.u32 32, %s62
    %s64 = sadd.s32 0, 0
    %p65 = scmp.eq.s32.totalorder 0, 0
    // Predicated region
    $region18: #{tpu_custom_call.1} parent=1 // pred_check
      %p66 = pneg %p65
    $region19: #{tpu_custom_call.1} parent=1 // pred_check_branch
      %68 = sbr.rel (%p66) target = $region21
    $region20: #{tpu_custom_call.1} parent=1 // pred_region
      %69 = vst [vmem:[#allocation7] sm:$0xff] 0.0
      %70 = vst [vmem:[#allocation7 + $0x8] sm:$0xff] 0.0
      %71 = vst [vmem:[#allocation7 + $0x10] sm:$0xff] 0.0
      %72 = vst [vmem:[#allocation7 + $0x18] sm:$0xff] 0.0
    $region21: #{tpu_custom_call.1} parent=1 // pred_fallthru
      _
    %p73 = scmp.eq.s32.totalorder %s64, 0
    // Predicated region
    $region22: #{tpu_custom_call.1} parent=1 // pred_check
      %p74 = pneg %p73
    $region23: #{tpu_custom_call.1} parent=1 // pred_check_branch
      %76 = sbr.rel (%p74) target = $region25
    $region24: #{tpu_custom_call.1} parent=1 // pred_region
      %v77 = vld [vmem:[#allocation2] sm:$0xff]
      %v78 = vld [vmem:[#allocation2 + $0x8] sm:$0xff]
      %v79 = vld [vmem:[#allocation2 + $0x10] sm:$0xff]
      %v80 = vld [vmem:[#allocation2 + $0x18] sm:$0xff]
      %vm81 = vcmp.lt.f32.partialorder %v77, 0.0
      %vm82 = vcmp.lt.f32.partialorder %v78, 0.0
      %vm83 = vcmp.lt.f32.partialorder %v79, 0.0
      %vm84 = vcmp.lt.f32.partialorder %v80, 0.0
      %v85 = vceil.f32 %v77
      %v86 = vceil.f32 %v78
      %v87 = vceil.f32 %v79
      %v88 = vceil.f32 %v80
      %v89 = vfloor.f32 %v77
      %v90 = vfloor.f32 %v78
      %v91 = vfloor.f32 %v79
      %v92 = vfloor.f32 %v80
      %v93 = vsel %vm81, %v85, %v89
      %v94 = vsel %vm82, %v86, %v90
      %v95 = vsel %vm83, %v87, %v91
      %v96 = vsel %vm84, %v88, %v92
      %v97 = vld [vmem:[#allocation5] sm:$0x3]
      %v98 = vld [vmem:[#allocation5 + $0x2] sm:$0x3]
      %v99 = vld [vmem:[#allocation5 + $0x4] sm:$0x3]
      %v100 = vld [vmem:[#allocation5 + $0x6] sm:$0x3]
      %v101 = vunpack.c.0.s8 %v97
      %v102 = vunpack.c.0.s8 %v98
      %v103 = vunpack.c.0.s8 %v99
      %v104 = vunpack.c.0.s8 %v100
      %v105 = vcvt.s32.f32 %v101
      %v106 = vcvt.s32.f32 %v102
      %v107 = vcvt.s32.f32 %v103
      %v108 = vcvt.s32.f32 %v104
      %v109 = vmul.f32 %v105, -1.4
      %v110 = vmul.f32 %v106, -1.4
      %v111 = vmul.f32 %v107, -1.4
      %v112 = vmul.f32 %v108, -1.4
      %v113 = vadd.f32 %v93, 1e-07
      %v114 = vadd.f32 %v94, 1e-07
      %v115 = vadd.f32 %v95, 1e-07
      %v116 = vadd.f32 %v96, 1e-07
      %v117 = vlog2.pop %v113
      %v118 = vmul.f32 %v117, 0.6931472
      %v119 = vlog2.pop %v114
      %v120 = vmul.f32 %v119, 0.6931472
      %v121 = vlog2.pop %v115
      %v122 = vmul.f32 %v121, 0.6931472
      %v123 = vlog2.pop %v116
      %v124 = vmul.f32 %v123, 0.6931472
      %v125 = vmul.f32 %v109, %v118
      %v126 = vmul.f32 %v110, %v120
      %v127 = vmul.f32 %v111, %v122
      %v128 = vmul.f32 %v112, %v124
      %v129 = vsub.f32 1.0, %v105
      %v130 = vsub.f32 1.0, %v106
      %v131 = vsub.f32 1.0, %v107
      %v132 = vsub.f32 1.0, %v108
      %v133 = vsub.f32 1.0000001, %v93
      %v134 = vsub.f32 1.0000001, %v94
      %v135 = vsub.f32 1.0000001, %v95
      %v136 = vsub.f32 1.0000001, %v96
      %v137 = vlog2.pop %v133
      %v138 = vmul.f32 %v137, 0.6931472
      %v139 = vlog2.pop %v134
      %v140 = vmul.f32 %v139, 0.6931472
      %v141 = vlog2.pop %v135
      %v142 = vmul.f32 %v141, 0.6931472
      %v143 = vlog2.pop %v136
      %v144 = vmul.f32 %v143, 0.6931472
      %v145 = vlog2.pop %v138
      %v146 = vmul.f32 %v145, 0.6931472
      %v147 = vlog2.pop %v140
      %v148 = vmul.f32 %v147, 0.6931472
      %v149 = vlog2.pop %v142
      %v150 = vmul.f32 %v149, 0.6931472
      %v151 = vlog2.pop %v144
      %v152 = vmul.f32 %v151, 0.6931472
      %v153 = vmul.f32 %v129, %v146
      %v154 = vmul.f32 %v130, %v148
      %v155 = vmul.f32 %v131, %v150
      %v156 = vmul.f32 %v132, %v152
      %v157 = vsub.f32 %v125, %v153
      %v158 = vsub.f32 %v126, %v154
      %v159 = vsub.f32 %v127, %v155
      %v160 = vsub.f32 %v128, %v156
      %v161 = vlaneseq
      %v162 = vshrl.u32 %v161, 7
      %v163 = vadd.s32 %v162, 8
      %v164 = vadd.s32 %v162, 16
      %v165 = vadd.s32 %v162, 24
      %v166 = vlaneseq
      %v167 = vand.u32 %v166, 127
      %s168 = smul.u32 %s64, 32
      %v169 = vstv %s168
      %v170 = vadd.s32 %v169, %v162
      %v171 = vadd.s32 %v169, %v163
      %v172 = vadd.s32 %v169, %v164
      %v173 = vadd.s32 %v169, %v165
      %v174 = vmul.u32 %v170, 128
      %v175 = vmul.u32 %v171, 128
      %v176 = vmul.u32 %v172, 128
      %v177 = vmul.u32 %v173, 128
      %v178 = vadd.s32 %v174, %v167
      %v179 = vadd.s32 %v175, %v167
      %v180 = vadd.s32 %v176, %v167
      %v181 = vadd.s32 %v177, %v167
      %vm182 = vcmp.lt.s32.totalorder %v178, 2048
      %vm183 = vcmp.lt.s32.totalorder %v179, 2048
      %vm184 = vcmp.lt.s32.totalorder %v180, 2048
      %vm185 = vcmp.lt.s32.totalorder %v181, 2048
      %v186 = vsel %vm182, %v157, 0.0
      %v187 = vsel %vm183, %v158, 0.0
      %v188 = vsel %vm184, %v159, 0.0
      %v189 = vsel %vm185, %v160, 0.0
      %v190 = vld [vmem:[#allocation7] sm:$0xff]
      %v191 = vld [vmem:[#allocation7 + $0x8] sm:$0xff]
      %v192 = vld [vmem:[#allocation7 + $0x10] sm:$0xff]
      %v193 = vld [vmem:[#allocation7 + $0x18] sm:$0xff]
      %v194 = vadd.f32 %v186, 0.0
      %v195 = vadd.f32 %v187, 0.0
      %v196 = vadd.f32 %v188, 0.0
      %v197 = vadd.f32 %v189, 0.0
      %v198 = vadd.f32 %v190, %v194
      %v199 = vadd.f32 %v191, %v195
      %v200 = vadd.f32 %v192, %v196
      %v201 = vadd.f32 %v193, %v197
      %202 = vst [vmem:[#allocation7] sm:$0xff] %v198
      %203 = vst [vmem:[#allocation7 + $0x8] sm:$0xff] %v199
      %204 = vst [vmem:[#allocation7 + $0x10] sm:$0xff] %v200
      %205 = vst [vmem:[#allocation7 + $0x18] sm:$0xff] %v201
    $region25: #{tpu_custom_call.1} parent=1 // pred_fallthru
      _
    // Predicated region
    $region26: #{tpu_custom_call.1} parent=1 // pred_check
      _
    $region27: #{tpu_custom_call.1} parent=1 // pred_check_branch
      %207 = sbr.rel (0) target = $region29
    $region28: #{tpu_custom_call.1} parent=1 // pred_region
      %s209 = ssub.s32 512, 512
      %210 = vsyncadd [#allocation4], %s209
      %s211 = sshll.u32 [#allocation7], 4
      %s212 = int_to_ptr.vmem [resolvable:$true] %s211
      %217 = dma.vmem_to_hbm [thread:$0]  %s212, 512, %s2, [#allocation4], 128, 128, 8
    $region29: #{tpu_custom_call.1} parent=1 // pred_fallthru
      _
    // Predicated region
    $region30: #{tpu_custom_call.1} parent=1 // pred_check
      _
    $region31: #{tpu_custom_call.1} parent=1 // pred_check_branch
      %219 = sbr.rel (0) target = $region33
    $region32: #{tpu_custom_call.1} parent=1 // pred_region
      %220 = dma.done [#allocation4], 512
    $region33: #{tpu_custom_call.1} parent=1 // pred_fallthru
      _
    %221 = vsyncpa [#allocation3], 1
    %222 = vsyncpa [#allocation6], 1
    %223 = vsyncpa [#allocation4], 1

</llo_original>
